<compile_context>
chip_gen: v7x
topology: tpu7x:2x2x1
jax: 0.10.0
libtpu: 0.0.40
codegen_flags: <defaults>
</compile_context>

<pallas_src>
import functools

import jax
import jax.numpy as jnp
from jax.experimental import pallas as pl
from jax.experimental.pallas import tpu as pltpu

EMBED_DIM = 32
HIDDEN = 256
LEAK = 0.3


def _round_up(n, m):
    return ((n + m - 1) // m) * m


def _leaky_relu(x, negative_slope=LEAK):
    # For 0 < slope < 1, LeakyReLU(x) == max(x, slope*x): mul + max on the VPU.
    return jnp.maximum(x, negative_slope * x)


def discriminator_kernel(x_ref, w1_ref, b1_ref, w2_ref, b2_ref, w3_ref, b3_ref,
                         o_ref):
    # x : (TB, E) f32        w1: (E, H) f32      b1: (1, H) f32
    # w2: (H, H) f32         b2: (1, H) f32
    # w3: (1, H) f32 (row)   b3: (1,)   f32 scalar in SMEM
    x = x_ref[...].astype(jnp.bfloat16)
    w1 = w1_ref[...].astype(jnp.bfloat16)
    h1 = jnp.dot(x, w1, preferred_element_type=jnp.float32)
    h1 = _leaky_relu(h1 + b1_ref[...])
    # TODO(synk): Dropout(0.2) is identity in eval mode; training-mode dropout
    # would use pltpu.prng_seed + pltpu.prng_random_bits.

    w2 = w2_ref[...].astype(jnp.bfloat16)
    h2 = jnp.dot(h1.astype(jnp.bfloat16), w2,
                 preferred_element_type=jnp.float32)
    h2 = _leaky_relu(h2 + b2_ref[...])

    # Final layer has N=1: do it as VPU multiply + lane reduction instead of
    # burning MXU pushes to produce a single output column.
    out = jnp.sum(h2 * w3_ref[...], axis=-1, keepdims=True) + b3_ref[0]
    o_ref[...] = out.astype(o_ref.dtype)


@functools.partial(jax.jit, static_argnames=("batch_tile",))
def discriminator_forward(x, params, *, batch_tile=512):
    """x: [B, embed_dim] float32 -> [B, 1] float32."""
    B, E = x.shape
    w1, b1, w2, b2, w3, b3 = params
    H = w1.shape[1]

    # ---- batch-tile selection -----------------------------------------------
    # Keep the tile a sublane multiple, cap it so the double-buffered pipeline
    # and f32 intermediates fit comfortably in 32 MiB scoped VMEM (v7x-safe),
    # and shrink to a single padded tile for tiny batches.
    tb = int(min(batch_tile, 4096))
    tb = max(8, (tb // 8) * 8)
    if B <= tb:
        tb = _round_up(B, 8)
    Bp = _round_up(B, tb)
    x_in = x if Bp == B else jnp.pad(x, ((0, Bp - B), (0, 0)))

    # Weight / bias prep (tiny, read once per call; casts to bf16 happen
    # in-kernel so no extra XLA passes over the big batch tensor are needed).
    w1f = w1.astype(jnp.float32)
    w2f = w2.astype(jnp.float32)
    w3_row = w3.reshape(1, H).astype(jnp.float32)      # (H,1) -> (1,H) row
    b1f = b1.reshape(1, H).astype(jnp.float32)
    b2f = b2.reshape(1, H).astype(jnp.float32)
    b3s = b3.reshape((1,)).astype(jnp.float32)         # scalar, lives in SMEM

    grid = (Bp // tb,)
    in_specs = [
        pl.BlockSpec((tb, E), lambda i: (i, 0)),                  # x tile
        pl.BlockSpec((E, H), lambda i: (0, 0)),                   # w1 (resident)
        pl.BlockSpec((1, H), lambda i: (0, 0)),                   # b1
        pl.BlockSpec((H, H), lambda i: (0, 0)),                   # w2 (resident)
        pl.BlockSpec((1, H), lambda i: (0, 0)),                   # b2
        pl.BlockSpec((1, H), lambda i: (0, 0)),                   # w3 row
        pl.BlockSpec(memory_space=pltpu.MemorySpace.SMEM),        # b3 scalar
    ]
    out_specs = pl.BlockSpec((tb, 1), lambda i: (i, 0))

    flops = 2 * Bp * (E * H + H * H + H)
    bytes_accessed = (Bp * E * 4 + E * H * 4 + H * H * 4
                      + 3 * H * 4 + 4 + Bp * 4)
    cost = pl.CostEstimate(flops=flops, transcendentals=0,
                           bytes_accessed=bytes_accessed)

    out = pl.pallas_call(
        discriminator_kernel,
        out_shape=jax.ShapeDtypeStruct((Bp, 1), jnp.float32),
        grid_spec=pltpu.PrefetchScalarGridSpec(
            num_scalar_prefetch=0,
            grid=grid,
            in_specs=in_specs,
            out_specs=out_specs,
        ),
        compiler_params=pltpu.CompilerParams(
            dimension_semantics=("parallel",),
            vmem_limit_bytes=32 * 1024 * 1024,
        ),
        cost_estimate=cost,
    )(x_in, w1f, b1f, w2f, b2f, w3_row, b3s)
    return out[:B]


def init_params(key, embed_dim=EMBED_DIM, hidden=HIDDEN):
    """Deterministic init mimicking nn.Linear's U(-1/sqrt(fan_in), 1/sqrt(fan_in))."""
    ks = jax.random.split(key, 6)

    def linear(kw, kb, fan_in, fan_out):
        bound = 1.0 / jnp.sqrt(fan_in)
        w = jax.random.uniform(kw, (fan_in, fan_out), jnp.float32, -bound, bound)
        b = jax.random.uniform(kb, (1, fan_out), jnp.float32, -bound, bound)
        return w, b

    w1, b1 = linear(ks[0], ks[1], embed_dim, hidden)
    w2, b2 = linear(ks[2], ks[3], hidden, hidden)
    w3, b3 = linear(ks[4], ks[5], hidden, 1)
    return (w1, b1, w2, b2, w3, b3)


def reference_forward(x, params):
    """Pure-JAX reference mirroring the kernel's bf16 matmul operands."""
    w1, b1, w2, b2, w3, b3 = params
    bf = lambda a: a.astype(jnp.bfloat16).astype(jnp.float32)
    lrelu = lambda a: jnp.maximum(a, LEAK * a)
    h1 = lrelu(bf(x) @ bf(w1) + b1)
    h2 = lrelu(bf(h1) @ bf(w2) + b2)
    return h2 @ w3 + b3


if __name__ == "__main__":
    key = jax.random.PRNGKey(0)
    kx, kp, kx2, kx3 = jax.random.split(key, 4)
    params = init_params(kp)

    # Small shape consistent with the module (batch=8, embed_dim=32).
    B = 8
    x = jax.random.normal(kx, (B, EMBED_DIM), jnp.float32)
    out = jax.block_until_ready(discriminator_forward(x, params))
    ref = reference_forward(x, params)
    assert out.shape == (B, 1)
    assert jnp.allclose(out, ref, atol=2e-2, rtol=2e-2), (
        f"max abs diff {jnp.max(jnp.abs(out - ref))}"
    )

    # Multi-step, pipelined / megacore-shardable path (grid=2).
    B2 = 512
    x2 = jax.random.normal(kx2, (B2, EMBED_DIM), jnp.float32)
    out2 = jax.block_until_ready(discriminator_forward(x2, params, batch_tile=256))
    ref2 = reference_forward(x2, params)
    assert out2.shape == (B2, 1)
    assert jnp.allclose(out2, ref2, atol=2e-2, rtol=2e-2), (
        f"max abs diff {jnp.max(jnp.abs(out2 - ref2))}"
    )

    # Non-sublane-multiple batch (exercises the conditional batch-pad path).
    B3 = 100
    x3 = jax.random.normal(kx3, (B3, EMBED_DIM), jnp.float32)
    out3 = jax.block_until_ready(discriminator_forward(x3, params))
    ref3 = reference_forward(x3, params)
    assert out3.shape == (B3, 1)
    assert jnp.allclose(out3, ref3, atol=2e-2, rtol=2e-2), (
        f"max abs diff {jnp.max(jnp.abs(out3 - ref3))}"
    )

    print("KERNEL_OK")
</pallas_src>

<mosaic_0001>
module attributes {stable_mosaic.version = 11 : i64} {
  func.func @discriminator_kernel(%arg0: i32, %arg1: memref<8x32xf32, #tpu.memory_space<vmem>>, %arg2: memref<32x256xf32, #tpu.memory_space<vmem>>, %arg3: memref<1x256xf32, #tpu.memory_space<vmem>>, %arg4: memref<256x256xf32, #tpu.memory_space<vmem>>, %arg5: memref<1x256xf32, #tpu.memory_space<vmem>>, %arg6: memref<1x256xf32, #tpu.memory_space<vmem>>, %arg7: memref<1xf32, #tpu.memory_space<smem>>, %arg8: memref<8x1xf32, #tpu.memory_space<vmem>>) attributes {dimension_semantics = [#tpu.dimension_semantics<parallel>], iteration_bounds = array<i64: 1>, scalar_prefetch = 0 : i64, scratch_operands = 0 : i64, tpu.core_type = #tpu.core_type<tc>, window_params = [{transform_indices = @transform_0, window_bounds = array<i64: 8, 32>}, {pipeline_mode = #tpu.pipeline_mode<synchronous>, transform_indices = @transform_1, window_bounds = array<i64: 32, 256>}, {pipeline_mode = #tpu.pipeline_mode<synchronous>, transform_indices = @transform_2, window_bounds = array<i64: 1, 256>}, {pipeline_mode = #tpu.pipeline_mode<synchronous>, transform_indices = @transform_3, window_bounds = array<i64: 256, 256>}, {pipeline_mode = #tpu.pipeline_mode<synchronous>, transform_indices = @transform_4, window_bounds = array<i64: 1, 256>}, {pipeline_mode = #tpu.pipeline_mode<synchronous>, transform_indices = @transform_5, window_bounds = array<i64: 1, 256>}, {transform_indices = @transform_6, window_bounds = array<i64: 1>}, {transform_indices = @transform_7, window_bounds = array<i64: 8, 1>}]} {
    %c0 = arith.constant 0 : index
    %c0_0 = arith.constant 0 : index
    %0 = vector.load %arg1[%c0, %c0_0] : memref<8x32xf32, #tpu.memory_space<vmem>>, vector<8x32xf32>
    %1 = arith.truncf %0 : vector<8x32xf32> to vector<8x32xbf16>
    %c0_1 = arith.constant 0 : index
    %c0_2 = arith.constant 0 : index
    %2 = vector.load %arg2[%c0_1, %c0_2] : memref<32x256xf32, #tpu.memory_space<vmem>>, vector<32x256xf32>
    %3 = arith.truncf %2 : vector<32x256xf32> to vector<32x256xbf16>
    %cst = arith.constant dense<0.000000e+00> : vector<8x256xf32>
    %4 = tpu.matmul %1, %3, %cst {dimension_numbers = #tpu.dot_dimension_numbers<[1], [0], [0], [1], [0, 0, 1, 1], [], []>} : vector<8x32xbf16>, vector<32x256xbf16>, vector<8x256xf32> -> vector<8x256xf32>
    %c0_3 = arith.constant 0 : index
    %c0_4 = arith.constant 0 : index
    %5 = vector.load %arg3[%c0_3, %c0_4] : memref<1x256xf32, #tpu.memory_space<vmem>>, vector<1x256xf32>
    %6 = vector.broadcast %5 : vector<1x256xf32> to vector<8x256xf32>
    %7 = arith.addf %4, %6 : vector<8x256xf32>
    %cst_5 = arith.constant 3.000000e-01 : f32
    %8 = vector.broadcast %cst_5 : f32 to vector<8x256xf32>
    %9 = arith.mulf %8, %7 : vector<8x256xf32>
    %10 = arith.maximumf %7, %9 : vector<8x256xf32>
    %c0_6 = arith.constant 0 : index
    %c0_7 = arith.constant 0 : index
    %11 = vector.load %arg4[%c0_6, %c0_7] : memref<256x256xf32, #tpu.memory_space<vmem>>, vector<256x256xf32>
    %12 = arith.truncf %11 : vector<256x256xf32> to vector<256x256xbf16>
    %13 = arith.truncf %10 : vector<8x256xf32> to vector<8x256xbf16>
    %cst_8 = arith.constant dense<0.000000e+00> : vector<8x256xf32>
    %14 = tpu.matmul %13, %12, %cst_8 {dimension_numbers = #tpu.dot_dimension_numbers<[1], [0], [0], [1], [0, 0, 1, 1], [], []>} : vector<8x256xbf16>, vector<256x256xbf16>, vector<8x256xf32> -> vector<8x256xf32>
    %c0_9 = arith.constant 0 : index
    %c0_10 = arith.constant 0 : index
    %15 = vector.load %arg5[%c0_9, %c0_10] : memref<1x256xf32, #tpu.memory_space<vmem>>, vector<1x256xf32>
    %16 = vector.broadcast %15 : vector<1x256xf32> to vector<8x256xf32>
    %17 = arith.addf %14, %16 : vector<8x256xf32>
    %cst_11 = arith.constant 3.000000e-01 : f32
    %18 = vector.broadcast %cst_11 : f32 to vector<8x256xf32>
    %19 = arith.mulf %18, %17 : vector<8x256xf32>
    %20 = arith.maximumf %17, %19 : vector<8x256xf32>
    %c0_12 = arith.constant 0 : index
    %c0_13 = arith.constant 0 : index
    %21 = vector.load %arg6[%c0_12, %c0_13] : memref<1x256xf32, #tpu.memory_space<vmem>>, vector<1x256xf32>
    %22 = vector.broadcast %21 : vector<1x256xf32> to vector<8x256xf32>
    %23 = arith.mulf %20, %22 : vector<8x256xf32>
    %cst_14 = arith.constant dense<0.000000e+00> : vector<8xf32>
    %24 = vector.multi_reduction <add>, %23, %cst_14 [1] : vector<8x256xf32> to vector<8xf32>
    %25 = vector.shape_cast %24 : vector<8xf32> to vector<8x1xf32>
    %c0_15 = arith.constant 0 : index
    %26 = memref.load %arg7[%c0_15] : memref<1xf32, #tpu.memory_space<smem>>
    %27 = vector.broadcast %26 : f32 to vector<8x1xf32>
    %28 = arith.addf %25, %27 : vector<8x1xf32>
    %c0_16 = arith.constant 0 : index
    %c0_17 = arith.constant 0 : index
    %29 = vector.load %arg8[%c0_16, %c0_17] : memref<8x1xf32, #tpu.memory_space<vmem>>, vector<8x1xf32>
    tpu.vector_store %arg8[%c0_16, %c0_17], %28 {strides = array<i32>} : memref<8x1xf32, #tpu.memory_space<vmem>>, vector<8x1xf32>,
    return
  }
  func.func @transform_0(%arg0: i32) -> (i32, i32) {
    %c0_i32 = arith.constant 0 : i32
    %c0_i32_0 = arith.constant 0 : i32
    return %arg0, %c0_i32 : i32, i32
  }
  func.func @transform_1(%arg0: i32) -> (i32, i32) {
    %c0_i32 = arith.constant 0 : i32
    %c0_i32_0 = arith.constant 0 : i32
    %c0_i32_1 = arith.constant 0 : i32
    return %c0_i32, %c0_i32_0 : i32, i32
  }
  func.func @transform_2(%arg0: i32) -> (i32, i32) {
    %c0_i32 = arith.constant 0 : i32
    %c0_i32_0 = arith.constant 0 : i32
    %c0_i32_1 = arith.constant 0 : i32
    return %c0_i32, %c0_i32_0 : i32, i32
  }
  func.func @transform_3(%arg0: i32) -> (i32, i32) {
    %c0_i32 = arith.constant 0 : i32
    %c0_i32_0 = arith.constant 0 : i32
    %c0_i32_1 = arith.constant 0 : i32
    return %c0_i32, %c0_i32_0 : i32, i32
  }
  func.func @transform_4(%arg0: i32) -> (i32, i32) {
    %c0_i32 = arith.constant 0 : i32
    %c0_i32_0 = arith.constant 0 : i32
    %c0_i32_1 = arith.constant 0 : i32
    return %c0_i32, %c0_i32_0 : i32, i32
  }
  func.func @transform_5(%arg0: i32) -> (i32, i32) {
    %c0_i32 = arith.constant 0 : i32
    %c0_i32_0 = arith.constant 0 : i32
    %c0_i32_1 = arith.constant 0 : i32
    return %c0_i32, %c0_i32_0 : i32, i32
  }
  func.func @transform_6(%arg0: i32) -> i32 {
    %c0_i32 = arith.constant 0 : i32
    %c0_i32_0 = arith.constant 0 : i32
    return %c0_i32 : i32
  }
  func.func @transform_7(%arg0: i32) -> (i32, i32) {
    %c0_i32 = arith.constant 0 : i32
    %c0_i32_0 = arith.constant 0 : i32
    return %arg0, %c0_i32 : i32, i32
  }
}

</mosaic_0001>

<llo_original>
// kernel: discriminator_forward.1
$region0: #{discriminator_forward.1}
  #allocation0 [shape = 'u32[]', space=smem, size = 0x4, offset = 0x4, fixed_abs, tag = 'smem constant byte address 0x4 - core index']
  #allocation1 [shape = 'u32[144,128]{1,0:T(1,128)}', space=vmem, size = 0x12000, scoped, tag = 'internal scratch']
  #allocation2 [shape = 'f32[1]{0:T(128)S(6)}', space=smem, size = 0x200, scoped, tag = 'scoped memory for discriminator_forward.1']
  %s0 = inlined_call_operand.vmem [shape: f32[8,32], index: 0, kind: input, shape index: {}]
  %s1 = inlined_call_operand.hbm [shape: f32[32,256], index: 1, kind: input, shape index: {}]
  %s2 = inlined_call_operand.vmem [shape: f32[1,256], index: 2, kind: input, shape index: {}]
  %s3 = inlined_call_operand.hbm [shape: f32[256,256], index: 3, kind: input, shape index: {}]
  %s4 = inlined_call_operand.vmem [shape: f32[1,256], index: 4, kind: input, shape index: {}]
  %s5 = inlined_call_operand.vmem [shape: f32[1,256], index: 5, kind: input, shape index: {}]
  %s6 = inlined_call_operand.<no memory space> [shape: f32[1], index: 6, kind: input, shape index: {}]
  %s7 = inlined_call_operand.vmem [shape: f32[8,1], index: 7, kind: output, shape index: {}]
  %s8 = sld [smem:[#allocation0]]
  $region46: #{discriminator_forward.1} parent=0
    _
  %s10 = ssub.s32 1, %s8
  %s11 = scalar_select 0, %s10, %s8
  %12 = sst [smem:[#allocation2]] %s6
  $region1: #{discriminator_forward.1} parent=0
    #allocation3 [shape = 'u8[32768]{0}', space=vmem, size = 0x8000, scoped, tag = 'input window, operand 1, single buffered']
    #allocation4 [shape = 's32[1]{0}', space=sflag, size = 0x4, scoped, tag = 'scoped memory for discriminator_forward.1']
    #allocation5 [shape = 'u8[262144]{0}', space=vmem, size = 0x40000, scoped, tag = 'input window, operand 3, single buffered']
    #allocation6 [shape = 's32[1]{0}', space=sflag, size = 0x4, scoped, tag = 'scoped memory for discriminator_forward.1']
    %13 = vsyncpa [#allocation4], 0
    %14 = vsyncpa [#allocation6], 0
    // Predicated region
    $region2: #{discriminator_forward.1} parent=1 // pred_check
      _
    $region3: #{discriminator_forward.1} parent=1 // pred_check_branch
      %16 = sbr.rel (0) target = $region5
    $region4: #{discriminator_forward.1} parent=1 // pred_region
      _
    $region5: #{discriminator_forward.1} parent=1 // pred_fallthru
      _
    // Predicated region
    $region6: #{discriminator_forward.1} parent=1 // pred_check
      _
    $region7: #{discriminator_forward.1} parent=1 // pred_check_branch
      %18 = sbr.rel (0) target = $region9
    $region8: #{discriminator_forward.1} parent=1 // pred_region
      %s20 = ssub.s32 1024, 1024
      %21 = vsyncadd [#allocation4], %s20
      %s22 = sshll.u32 [#allocation3], 4
      %s23 = int_to_ptr.vmem [resolvable:$true] %s22
      %28 = dma.hbm_to_vmem [thread:$0]  %s1, 1024, %s23, [#allocation4], 256, 256, 16
    $region9: #{discriminator_forward.1} parent=1 // pred_fallthru
      _
    // Predicated region
    $region10: #{discriminator_forward.1} parent=1 // pred_check
      _
    $region11: #{discriminator_forward.1} parent=1 // pred_check_branch
      %30 = sbr.rel (0) target = $region13
    $region12: #{discriminator_forward.1} parent=1 // pred_region
      _
    $region13: #{discriminator_forward.1} parent=1 // pred_fallthru
      _
    // Predicated region
    $region14: #{discriminator_forward.1} parent=1 // pred_check
      _
    $region15: #{discriminator_forward.1} parent=1 // pred_check_branch
      %32 = sbr.rel (0) target = $region17
    $region16: #{discriminator_forward.1} parent=1 // pred_region
      %s34 = ssub.s32 8192, 8192
      %35 = vsyncadd [#allocation6], %s34
      %s36 = sshll.u32 [#allocation5], 4
      %s37 = int_to_ptr.vmem [resolvable:$true] %s36
      %42 = dma.hbm_to_vmem [thread:$0]  %s3, 8192, %s37, [#allocation6], 256, 256, 16
    $region17: #{discriminator_forward.1} parent=1 // pred_fallthru
      _
    // Predicated region
    $region18: #{discriminator_forward.1} parent=1 // pred_check
      _
    $region19: #{discriminator_forward.1} parent=1 // pred_check_branch
      %44 = sbr.rel (0) target = $region21
    $region20: #{discriminator_forward.1} parent=1 // pred_region
      _
    $region21: #{discriminator_forward.1} parent=1 // pred_fallthru
      _
    // Predicated region
    $region22: #{discriminator_forward.1} parent=1 // pred_check
      _
    $region23: #{discriminator_forward.1} parent=1 // pred_check_branch
      %46 = sbr.rel (0) target = $region25
    $region24: #{discriminator_forward.1} parent=1 // pred_region
      _
    $region25: #{discriminator_forward.1} parent=1 // pred_fallthru
      _
    // Predicated region
    $region26: #{discriminator_forward.1} parent=1 // pred_check
      _
    $region27: #{discriminator_forward.1} parent=1 // pred_check_branch
      %48 = sbr.rel (0) target = $region29
    $region28: #{discriminator_forward.1} parent=1 // pred_region
      _
    $region29: #{discriminator_forward.1} parent=1 // pred_fallthru
      _
    // Predicated region
    $region30: #{discriminator_forward.1} parent=1 // pred_check
      _
    $region31: #{discriminator_forward.1} parent=1 // pred_check_branch
      %50 = sbr.rel (0) target = $region33
    $region32: #{discriminator_forward.1} parent=1 // pred_region
      %51 = dma.done [#allocation4], 1024
    $region33: #{discriminator_forward.1} parent=1 // pred_fallthru
      _
    // Predicated region
    $region34: #{discriminator_forward.1} parent=1 // pred_check
      _
    $region35: #{discriminator_forward.1} parent=1 // pred_check_branch
      %53 = sbr.rel (0) target = $region37
    $region36: #{discriminator_forward.1} parent=1 // pred_region
      %54 = dma.done [#allocation6], 8192
    $region37: #{discriminator_forward.1} parent=1 // pred_fallthru
      _
    %v56 = vld [vmem:[%s0] sm:$0xff]
    %v57 = vpack.c.bf16 %v56, %v56
    %v58 = vld [vmem:[#allocation3] sm:$0xff]
    %v59 = vld [vmem:[#allocation3 + $0x8] sm:$0xff]
    %v60 = vld [vmem:[#allocation3 + $0x10] sm:$0xff]
    %v61 = vld [vmem:[#allocation3 + $0x18] sm:$0xff]
    %v62 = vld [vmem:[#allocation3 + $0x20] sm:$0xff]
    %v63 = vld [vmem:[#allocation3 + $0x28] sm:$0xff]
    %v64 = vld [vmem:[#allocation3 + $0x30] sm:$0xff]
    %v65 = vld [vmem:[#allocation3 + $0x38] sm:$0xff]
    %v66 = vpack.c.bf16 %v60, %v58
    %v67 = vpack.c.bf16 %v61, %v59
    %v68 = vpack.c.bf16 %v64, %v62
    %v69 = vpack.c.bf16 %v65, %v63
    %v70 = vld [vmem:[%s2] sm:$0x3]
    %v72 = vlaneseq
    %v73 = vshrl.u32 %v72, 7
    %v74 = vsub.s32 0, %v73
    %v75 = vrot.slane %v70, %v74
    %v76 = vlaneseq
    %v77 = vshrl.u32 %v76, 7
    %v78 = vsub.s32 1, %v77
    %v79 = vrot.slane %v70, %v78
    %vm82 = vcmask 261120
    %v84 = vsel %vm82, %v57, 0
    %86 = vmatprep.subr.bf16.mxu0 %v67
    %87 = vmatpush1.bf16.msra.mxu0 %v66
    %88 = vmatprep.subr.bf16.mxu0 %v69
    %89 = vmatpush1.bf16.msra.mxu0 %v68
    %90 = vmatprep.subr.bf16.mxu0 0
    %91 = vmatpush1.bf16.msra.mxu0 0
    %92 = vmatprep.subr.bf16.mxu0 0
    %93 = vmatpush1.bf16.msra.mxu0 0
    %94 = vmatprep.subr.bf16.mxu0 0
    %95 = vmatpush1.bf16.msra.mxu0 0
    %96 = vmatprep.subr.bf16.mxu0 0
    %97 = vmatpush1.bf16.msra.mxu0 0
    %98 = vmatprep.subr.bf16.mxu0 0
    %99 = vmatpush1.bf16.msra.mxu0 0
    %100 = vmatprep.subr.bf16.mxu0 0
    %101 = vmatpush1.bf16.msra.mxu0 0
    %102 = vmatprep.subr.bf16.mxu0 0
    %103 = vmatpush1.bf16.msra.mxu0 0
    %104 = vmatprep.subr.bf16.mxu0 0
    %105 = vmatpush1.bf16.msra.mxu0 0
    %106 = vmatprep.subr.bf16.mxu0 0
    %107 = vmatpush1.bf16.msra.mxu0 0
    %108 = vmatprep.subr.bf16.mxu0 0
    %109 = vmatpush1.bf16.msra.mxu0 0
    %110 = vmatprep.subr.bf16.mxu0 0
    %111 = vmatpush1.bf16.msra.mxu0 0
    %112 = vmatprep.subr.bf16.mxu0 0
    %113 = vmatpush1.bf16.msra.mxu0 0
    %114 = vmatprep.subr.bf16.mxu0 0
    %115 = vmatpush1.bf16.msra.mxu0 0
    %116 = vmatprep.subr.bf16.mxu0 0
    %117 = vmatpush1.bf16.msra.mxu0 0
    %118 = vmatprep.mubr.bf16.mxu0 0
    %119 = vmatmul.mubr.bf16.gmra.mrb[0].mxu0 %v84
    %v120 = vpop.f32.mrb[0].mxu0
    %v121 = vadd.f32 %v75, %v120
    %v122 = vpop.f32.mrb[0].mxu0
    %v123 = vadd.f32 %v79, %v122
    %v124 = vpop.f32.mrb[0].mxu0
    %v125 = vpop.f32.mrb[0].mxu0
    %126 = vdwg.mxu0
    %v127 = vmul.f32 %v121, 0.3
    %v128 = vmul.f32 %v123, 0.3
    %v129 = vmax.f32 %v121, %v127
    %v130 = vmax.f32 %v123, %v128
    %v131 = vld [vmem:[#allocation5] sm:$0xff]
    %v132 = vld [vmem:[#allocation5 + $0x8] sm:$0xff]
    %v133 = vld [vmem:[#allocation5 + $0x10] sm:$0xff]
    %v134 = vld [vmem:[#allocation5 + $0x18] sm:$0xff]
    %v135 = vld [vmem:[#allocation5 + $0x20] sm:$0xff]
    %v136 = vld [vmem:[#allocation5 + $0x28] sm:$0xff]
    %v137 = vld [vmem:[#allocation5 + $0x30] sm:$0xff]
    %v138 = vld [vmem:[#allocation5 + $0x38] sm:$0xff]
    %v139 = vld [vmem:[#allocation5 + $0x40] sm:$0xff]
    %v140 = vld [vmem:[#allocation5 + $0x48] sm:$0xff]
    %v141 = vld [vmem:[#allocation5 + $0x50] sm:$0xff]
    %v142 = vld [vmem:[#allocation5 + $0x58] sm:$0xff]
    %v143 = vld [vmem:[#allocation5 + $0x60] sm:$0xff]
    %v144 = vld [vmem:[#allocation5 + $0x68] sm:$0xff]
    %v145 = vld [vmem:[#allocation5 + $0x70] sm:$0xff]
    %v146 = vld [vmem:[#allocation5 + $0x78] sm:$0xff]
    %v147 = vld [vmem:[#allocation5 + $0x80] sm:$0xff]
    %v148 = vld [vmem:[#allocation5 + $0x88] sm:$0xff]
    %v149 = vld [vmem:[#allocation5 + $0x90] sm:$0xff]
    %v150 = vld [vmem:[#allocation5 + $0x98] sm:$0xff]
    %v151 = vld [vmem:[#allocation5 + $0xa0] sm:$0xff]
    %v152 = vld [vmem:[#allocation5 + $0xa8] sm:$0xff]
    %v153 = vld [vmem:[#allocation5 + $0xb0] sm:$0xff]
    %v154 = vld [vmem:[#allocation5 + $0xb8] sm:$0xff]
    %v155 = vld [vmem:[#allocation5 + $0xc0] sm:$0xff]
    %v156 = vld [vmem:[#allocation5 + $0xc8] sm:$0xff]
    %v157 = vld [vmem:[#allocation5 + $0xd0] sm:$0xff]
    %v158 = vld [vmem:[#allocation5 + $0xd8] sm:$0xff]
    %v159 = vld [vmem:[#allocation5 + $0xe0] sm:$0xff]
    %v160 = vld [vmem:[#allocation5 + $0xe8] sm:$0xff]
    %v161 = vld [vmem:[#allocation5 + $0xf0] sm:$0xff]
    %v162 = vld [vmem:[#allocation5 + $0xf8] sm:$0xff]
    %v163 = vld [vmem:[#allocation5 + $0x100] sm:$0xff]
    %v164 = vld [vmem:[#allocation5 + $0x108] sm:$0xff]
    %v165 = vld [vmem:[#allocation5 + $0x110] sm:$0xff]
    %v166 = vld [vmem:[#allocation5 + $0x118] sm:$0xff]
    %v167 = vld [vmem:[#allocation5 + $0x120] sm:$0xff]
    %v168 = vld [vmem:[#allocation5 + $0x128] sm:$0xff]
    %v169 = vld [vmem:[#allocation5 + $0x130] sm:$0xff]
    %v170 = vld [vmem:[#allocation5 + $0x138] sm:$0xff]
    %v171 = vld [vmem:[#allocation5 + $0x140] sm:$0xff]
    %v172 = vld [vmem:[#allocation5 + $0x148] sm:$0xff]
    %v173 = vld [vmem:[#allocation5 + $0x150] sm:$0xff]
    %v174 = vld [vmem:[#allocation5 + $0x158] sm:$0xff]
    %v175 = vld [vmem:[#allocation5 + $0x160] sm:$0xff]
    %v176 = vld [vmem:[#allocation5 + $0x168] sm:$0xff]
    %v177 = vld [vmem:[#allocation5 + $0x170] sm:$0xff]
    %v178 = vld [vmem:[#allocation5 + $0x178] sm:$0xff]
    %v179 = vld [vmem:[#allocation5 + $0x180] sm:$0xff]
    %v180 = vld [vmem:[#allocation5 + $0x188] sm:$0xff]
    %v181 = vld [vmem:[#allocation5 + $0x190] sm:$0xff]
    %v182 = vld [vmem:[#allocation5 + $0x198] sm:$0xff]
    %v183 = vld [vmem:[#allocation5 + $0x1a0] sm:$0xff]
    %v184 = vld [vmem:[#allocation5 + $0x1a8] sm:$0xff]
    %v185 = vld [vmem:[#allocation5 + $0x1b0] sm:$0xff]
    %v186 = vld [vmem:[#allocation5 + $0x1b8] sm:$0xff]
    %v187 = vld [vmem:[#allocation5 + $0x1c0] sm:$0xff]
    %v188 = vld [vmem:[#allocation5 + $0x1c8] sm:$0xff]
    %v189 = vld [vmem:[#allocation5 + $0x1d0] sm:$0xff]
    %v190 = vld [vmem:[#allocation5 + $0x1d8] sm:$0xff]
    %v191 = vld [vmem:[#allocation5 + $0x1e0] sm:$0xff]
    %v192 = vld [vmem:[#allocation5 + $0x1e8] sm:$0xff]
    %v193 = vld [vmem:[#allocation5 + $0x1f0] sm:$0xff]
    %v194 = vld [vmem:[#allocation5 + $0x1f8] sm:$0xff]
    %v195 = vpack.c.bf16 %v133, %v131
    %v196 = vpack.c.bf16 %v134, %v132
    %v197 = vpack.c.bf16 %v137, %v135
    %v198 = vpack.c.bf16 %v138, %v136
    %v199 = vpack.c.bf16 %v141, %v139
    %v200 = vpack.c.bf16 %v142, %v140
    %v201 = vpack.c.bf16 %v145, %v143
    %v202 = vpack.c.bf16 %v146, %v144
    %v203 = vpack.c.bf16 %v149, %v147
    %v204 = vpack.c.bf16 %v150, %v148
    %v205 = vpack.c.bf16 %v153, %v151
    %v206 = vpack.c.bf16 %v154, %v152
    %v207 = vpack.c.bf16 %v157, %v155
    %v208 = vpack.c.bf16 %v158, %v156
    %v209 = vpack.c.bf16 %v161, %v159
    %v210 = vpack.c.bf16 %v162, %v160
    %v211 = vpack.c.bf16 %v165, %v163
    %v212 = vpack.c.bf16 %v166, %v164
    %v213 = vpack.c.bf16 %v169, %v167
    %v214 = vpack.c.bf16 %v170, %v168
    %v215 = vpack.c.bf16 %v173, %v171
    %v216 = vpack.c.bf16 %v174, %v172
    %v217 = vpack.c.bf16 %v177, %v175
    %v218 = vpack.c.bf16 %v178, %v176
    %v219 = vpack.c.bf16 %v181, %v179
    %v220 = vpack.c.bf16 %v182, %v180
    %v221 = vpack.c.bf16 %v185, %v183
    %v222 = vpack.c.bf16 %v186, %v184
    %v223 = vpack.c.bf16 %v189, %v187
    %v224 = vpack.c.bf16 %v190, %v188
    %v225 = vpack.c.bf16 %v193, %v191
    %v226 = vpack.c.bf16 %v194, %v192
    %v227 = vpack.c.bf16 %v129, %v129
    %v228 = vpack.c.bf16 %v130, %v130
    %v229 = vld [vmem:[%s4] sm:$0x3]
    %v231 = vlaneseq
    %v232 = vshrl.u32 %v231, 7
    %v233 = vsub.s32 0, %v232
    %v234 = vrot.slane %v229, %v233
    %v235 = vlaneseq
    %v236 = vshrl.u32 %v235, 7
    %v237 = vsub.s32 1, %v236
    %v238 = vrot.slane %v229, %v237
    %241 = vmatprep.subr.bf16.mxu0 %v196
    %242 = vmatpush1.bf16.msra.mxu0 %v195
    %243 = vmatprep.subr.bf16.mxu0 %v198
    %244 = vmatpush1.bf16.msra.mxu0 %v197
    %245 = vmatprep.subr.bf16.mxu0 %v200
    %246 = vmatpush1.bf16.msra.mxu0 %v199
    %247 = vmatprep.subr.bf16.mxu0 %v202
    %248 = vmatpush1.bf16.msra.mxu0 %v201
    %249 = vmatprep.subr.bf16.mxu0 %v204
    %250 = vmatpush1.bf16.msra.mxu0 %v203
    %251 = vmatprep.subr.bf16.mxu0 %v206
    %252 = vmatpush1.bf16.msra.mxu0 %v205
    %253 = vmatprep.subr.bf16.mxu0 %v208
    %254 = vmatpush1.bf16.msra.mxu0 %v207
    %255 = vmatprep.subr.bf16.mxu0 %v210
    %256 = vmatpush1.bf16.msra.mxu0 %v209
    %257 = vmatprep.subr.bf16.mxu0 %v212
    %258 = vmatpush1.bf16.msra.mxu0 %v211
    %259 = vmatprep.subr.bf16.mxu0 %v214
    %260 = vmatpush1.bf16.msra.mxu0 %v213
    %261 = vmatprep.subr.bf16.mxu0 %v216
    %262 = vmatpush1.bf16.msra.mxu0 %v215
    %263 = vmatprep.subr.bf16.mxu0 %v218
    %264 = vmatpush1.bf16.msra.mxu0 %v217
    %265 = vmatprep.subr.bf16.mxu0 %v220
    %266 = vmatpush1.bf16.msra.mxu0 %v219
    %267 = vmatprep.subr.bf16.mxu0 %v222
    %268 = vmatpush1.bf16.msra.mxu0 %v221
    %269 = vmatprep.subr.bf16.mxu0 %v224
    %270 = vmatpush1.bf16.msra.mxu0 %v223
    %271 = vmatprep.subr.bf16.mxu0 %v226
    %272 = vmatpush1.bf16.msra.mxu0 %v225
    %273 = vmatprep.mubr.bf16.mxu0 %v228
    %274 = vmatmul.mubr.bf16.gmra.mrb[0].mxu0 %v227
    %v275 = vpop.f32.mrb[0].mxu0
    %v276 = vadd.f32 %v234, %v275
    %v277 = vpop.f32.mrb[0].mxu0
    %v278 = vadd.f32 %v238, %v277
    %v279 = vpop.f32.mrb[0].mxu0
    %v280 = vpop.f32.mrb[0].mxu0
    %281 = vdwg.mxu0
    %v282 = vmul.f32 %v276, 0.3
    %v283 = vmul.f32 %v278, 0.3
    %v284 = vmax.f32 %v276, %v282
    %v285 = vmax.f32 %v278, %v283
    %v286 = vld [vmem:[%s5] sm:$0x3]
    %v288 = vlaneseq
    %v289 = vshrl.u32 %v288, 7
    %v290 = vsub.s32 0, %v289
    %v291 = vrot.slane %v286, %v290
    %v292 = vlaneseq
    %v293 = vshrl.u32 %v292, 7
    %v294 = vsub.s32 1, %v293
    %v295 = vrot.slane %v286, %v294
    %v298 = vmul.f32 %v284, %v291
    %v299 = vmul.f32 %v285, %v295
    %v300 = vadd.f32 %v298, %v299
    %301 = vadd.xlane.f32.xlu0 %v300
    %v302 = vpop.xlane.xlu0 %301
    %s303 = sld [smem:[#allocation2]]
    %v304 = vstv %s303
    %v305 = vadd.f32 %v302, %v304
    %vm306 = vcmask 7168
    %307 = vst.msk [vmem:[%s7] sm:$0xff] %vm306, %v305
    // Predicated region
    $region38: #{discriminator_forward.1} parent=1 // pred_check
      _
    $region39: #{discriminator_forward.1} parent=1 // pred_check_branch
      %309 = sbr.rel (0) target = $region41
    $region40: #{discriminator_forward.1} parent=1 // pred_region
      _
    $region41: #{discriminator_forward.1} parent=1 // pred_fallthru
      _
    // Predicated region
    $region42: #{discriminator_forward.1} parent=1 // pred_check
      _
    $region43: #{discriminator_forward.1} parent=1 // pred_check_branch
      %311 = sbr.rel (0) target = $region45
    $region44: #{discriminator_forward.1} parent=1 // pred_region
      _
    $region45: #{discriminator_forward.1} parent=1 // pred_fallthru
      _
    %312 = vsyncpa [#allocation4], 1
    %313 = vsyncpa [#allocation6], 1

</llo_original>
